<compile_context>
chip_gen: v7x
topology: tpu7x:2x2x1
jax: 0.10.0
libtpu: 0.0.40
codegen_flags: <defaults>
</compile_context>

<pallas_src>
import jax
import jax.numpy as jnp
import numpy as np
from jax.experimental import pallas as pl
from jax.experimental.pallas import tpu as pltpu

# Table sizes fixed by the module definition.
HOUR_SIZE, WEEKDAY_SIZE, DAY_SIZE, MONTH_SIZE = 24, 7, 32, 13
# Offsets of each (pre-scaled) table inside the combined 128-entry SMEM table.
HOUR_OFF = 0
WEEKDAY_OFF = HOUR_OFF + HOUR_SIZE          # 24
DAY_OFF = WEEKDAY_OFF + WEEKDAY_SIZE        # 31
MONTH_OFF = DAY_OFF + DAY_SIZE              # 63
TAB_LEN = 128                               # 24 + 7 + 32 + 13 = 76 <= 128


def temp_embed_kernel(codes_ref, tab_ref, b_ref, o_ref):
    # codes_ref: [tile_rows, 128] int32 (VMEM), each element packs (month, day, weekday, hour)
    # tab_ref:   [128] float32 (SMEM), concatenated tables already scaled by Linear weights
    # b_ref:     [1]   float32 (SMEM), Linear bias
    # o_ref:     [tile_rows, 128] float32 (VMEM), lane-dense output slab
    codes = codes_ref[...]                       # [tr, 128] int32
    month = codes & 0xFF
    day = (codes >> 8) & 0xFF
    weekday = (codes >> 16) & 0xFF
    hour = (codes >> 24) & 0xFF                  # codes are non-negative -> arithmetic shift ok

    def lookup(idx, offset, size):
        # Tiny-table gather as a select chain (pure VPU, ~2 ops/entry, no cross-lane work).
        r = jnp.full(idx.shape, tab_ref[offset], dtype=jnp.float32)
        for j in range(1, size):
            r = jnp.where(idx == j, tab_ref[offset + j], r)
        return r

    acc = (lookup(hour, HOUR_OFF, HOUR_SIZE)
           + lookup(weekday, WEEKDAY_OFF, WEEKDAY_SIZE)
           + lookup(day, DAY_OFF, DAY_SIZE)
           + lookup(month, MONTH_OFF, MONTH_SIZE)
           + b_ref[0])
    o_ref[...] = acc


def temp_embedding(x_int, hour_tab, weekday_tab, day_tab, month_tab, w, b,
                   *, tile_rows=512):
    # x_int:      [B, L, 4] integer, feature order (month, day, weekday, hour)
    # *_tab:      nn.Embedding(size, 1) weights, shape [size, 1] float32
    # w, b:       nn.Linear(4, 1) weight [1, 4] and bias [1]
    B, L, C = x_int.shape
    assert C >= 4
    N = B * L

    xi = x_int[..., :4].reshape(N, 4).astype(jnp.int32)
    month, day, weekday, hour = xi[:, 0], xi[:, 1], xi[:, 2], xi[:, 3]
    # Pack the four small indices into one int32 per row (4x less input traffic).
    codes = month | (day << 8) | (weekday << 16) | (hour << 24)      # [N] int32

    # Lane-dense layout: N rows -> [rows_pad, 128] with rows_pad a multiple of tile_rows.
    rows = max(1, -(-N // 128))
    tile_rows = min(tile_rows, ((rows + 7) // 8) * 8)                # multiple of 8
    grid_rows = -(-rows // tile_rows)
    rows_pad = grid_rows * tile_rows
    n_pad = rows_pad * 128
    codes_pad = jnp.zeros((n_pad,), jnp.int32).at[:N].set(codes)     # pad idx=0 (valid), trimmed later
    codes2d = codes_pad.reshape(rows_pad, 128)

    # Fused table: concat the four dim-1 tables, pre-scaled by the Linear weights.
    scaled_tab = jnp.zeros((TAB_LEN,), jnp.float32)
    scaled_tab = scaled_tab.at[HOUR_OFF:HOUR_OFF + HOUR_SIZE].set(w[0, 0] * hour_tab[:, 0])
    scaled_tab = scaled_tab.at[WEEKDAY_OFF:WEEKDAY_OFF + WEEKDAY_SIZE].set(w[0, 1] * weekday_tab[:, 0])
    scaled_tab = scaled_tab.at[DAY_OFF:DAY_OFF + DAY_SIZE].set(w[0, 2] * day_tab[:, 0])
    scaled_tab = scaled_tab.at[MONTH_OFF:MONTH_OFF + MONTH_SIZE].set(w[0, 3] * month_tab[:, 0])
    bias = b.reshape(1).astype(jnp.float32)

    out2d = pl.pallas_call(
        temp_embed_kernel,
        out_shape=jax.ShapeDtypeStruct((rows_pad, 128), jnp.float32),
        grid=(grid_rows,),
        in_specs=[
            pl.BlockSpec((tile_rows, 128), lambda i: (i, 0)),              # packed codes (VMEM tile)
            pl.BlockSpec(memory_space=pltpu.MemorySpace.SMEM),             # fused scaled table
            pl.BlockSpec(memory_space=pltpu.MemorySpace.SMEM),             # bias
        ],
        out_specs=pl.BlockSpec((tile_rows, 128), lambda i: (i, 0)),        # lane-dense output slab
        compiler_params=pltpu.CompilerParams(
            dimension_semantics=("parallel",),
        ),
        cost_estimate=pl.CostEstimate(
            flops=int(8 * n_pad),                 # ~a few VPU ops per element, no MXU
            transcendentals=0,
            bytes_accessed=int(8 * n_pad + 4 * TAB_LEN + 4),
        ),
    )(codes2d, scaled_tab, bias)

    return out2d.reshape(-1)[:N].reshape(B, L, 1)


def ref_forward(x_int, hour_tab, weekday_tab, day_tab, month_tab, w, b):
    # pure-JAX reference mirroring the PyTorch forward
    x = x_int.astype(jnp.int32)
    hour_x = hour_tab[x[:, :, 3], 0][..., None]
    weekday_x = weekday_tab[x[:, :, 2], 0][..., None]
    day_x = day_tab[x[:, :, 1], 0][..., None]
    month_x = month_tab[x[:, :, 0], 0][..., None]
    cat = jnp.concatenate([hour_x, weekday_x, day_x, month_x], axis=2)   # [B,L,4]
    return cat @ w.T + b                                                 # [B,L,1]


if __name__ == "__main__":
    key = jax.random.PRNGKey(0)
    kh, kw, kd, km, klw, klb, kx = jax.random.split(key, 7)

    # Parameters (shapes from __init__: Embedding(size, 1) tables, Linear(4, 1)).
    hour_tab = jax.random.normal(kh, (HOUR_SIZE, 1), jnp.float32)
    weekday_tab = jax.random.normal(kw, (WEEKDAY_SIZE, 1), jnp.float32)
    day_tab = jax.random.normal(kd, (DAY_SIZE, 1), jnp.float32)
    month_tab = jax.random.normal(km, (MONTH_SIZE, 1), jnp.float32)
    w = jax.random.normal(klw, (1, 4), jnp.float32) * 0.5
    b = jax.random.normal(klb, (1,), jnp.float32) * 0.1
    # TODO(synk): the freq=='t' minute-embedding branch is never used in forward(); not implemented.

    # Input: [B, L, 4] with valid index ranges (month, day, weekday, hour).
    B, L = 2, 8
    kx0, kx1, kx2, kx3 = jax.random.split(kx, 4)
    month = jax.random.randint(kx0, (B, L, 1), 0, MONTH_SIZE, jnp.int32)
    day = jax.random.randint(kx1, (B, L, 1), 0, DAY_SIZE, jnp.int32)
    weekday = jax.random.randint(kx2, (B, L, 1), 0, WEEKDAY_SIZE, jnp.int32)
    hour = jax.random.randint(kx3, (B, L, 1), 0, HOUR_SIZE, jnp.int32)
    x = jnp.concatenate([month, day, weekday, hour], axis=-1)            # [2, 8, 4]

    y = temp_embedding(x, hour_tab, weekday_tab, day_tab, month_tab, w, b)
    y = jax.block_until_ready(y)

    y_ref = ref_forward(x, hour_tab, weekday_tab, day_tab, month_tab, w, b)
    np.testing.assert_allclose(np.asarray(y), np.asarray(y_ref), rtol=1e-5, atol=1e-5)

    print("KERNEL_OK")
</pallas_src>

<mosaic_0001>
module attributes {stable_mosaic.version = 11 : i64} {
  func.func @temp_embed_kernel(%arg0: i32, %arg1: memref<8x128xi32, #tpu.memory_space<vmem>>, %arg2: memref<128xf32, #tpu.memory_space<smem>>, %arg3: memref<1xf32, #tpu.memory_space<smem>>, %arg4: memref<8x128xf32, #tpu.memory_space<vmem>>) attributes {dimension_semantics = [#tpu.dimension_semantics<parallel>], iteration_bounds = array<i64: 1>, scalar_prefetch = 0 : i64, scratch_operands = 0 : i64, tpu.core_type = #tpu.core_type<tc>, window_params = [{transform_indices = @transform_0, window_bounds = array<i64: 8, 128>}, {transform_indices = @transform_1, window_bounds = array<i64: 128>}, {transform_indices = @transform_2, window_bounds = array<i64: 1>}, {transform_indices = @transform_3, window_bounds = array<i64: 8, 128>}]} {
    %c0 = arith.constant 0 : index
    %c0_0 = arith.constant 0 : index
    %0 = vector.load %arg1[%c0, %c0_0] : memref<8x128xi32, #tpu.memory_space<vmem>>, vector<8x128xi32>
    %c255_i32 = arith.constant 255 : i32
    %1 = vector.broadcast %c255_i32 : i32 to vector<8x128xi32>
    %2 = arith.andi %0, %1 : vector<8x128xi32>
    %c8_i32 = arith.constant 8 : i32
    %3 = vector.broadcast %c8_i32 : i32 to vector<8x128xi32>
    %4 = arith.shrsi %0, %3 : vector<8x128xi32>
    %c255_i32_1 = arith.constant 255 : i32
    %5 = vector.broadcast %c255_i32_1 : i32 to vector<8x128xi32>
    %6 = arith.andi %4, %5 : vector<8x128xi32>
    %c16_i32 = arith.constant 16 : i32
    %7 = vector.broadcast %c16_i32 : i32 to vector<8x128xi32>
    %8 = arith.shrsi %0, %7 : vector<8x128xi32>
    %c255_i32_2 = arith.constant 255 : i32
    %9 = vector.broadcast %c255_i32_2 : i32 to vector<8x128xi32>
    %10 = arith.andi %8, %9 : vector<8x128xi32>
    %c24_i32 = arith.constant 24 : i32
    %11 = vector.broadcast %c24_i32 : i32 to vector<8x128xi32>
    %12 = arith.shrsi %0, %11 : vector<8x128xi32>
    %c255_i32_3 = arith.constant 255 : i32
    %13 = vector.broadcast %c255_i32_3 : i32 to vector<8x128xi32>
    %14 = arith.andi %12, %13 : vector<8x128xi32>
    %c0_4 = arith.constant 0 : index
    %15 = memref.load %arg2[%c0_4] : memref<128xf32, #tpu.memory_space<smem>>
    %16 = vector.broadcast %15 : f32 to vector<8x128xf32>
    %c1_i32 = arith.constant 1 : i32
    %17 = vector.broadcast %c1_i32 : i32 to vector<8x128xi32>
    %18 = arith.cmpi eq, %14, %17 : vector<8x128xi32>
    %c1 = arith.constant 1 : index
    %19 = memref.load %arg2[%c1] : memref<128xf32, #tpu.memory_space<smem>>
    %20 = vector.broadcast %19 : f32 to vector<8x128xf32>
    %21 = arith.select %18, %20, %16 : vector<8x128xi1>, vector<8x128xf32>
    %c2_i32 = arith.constant 2 : i32
    %22 = vector.broadcast %c2_i32 : i32 to vector<8x128xi32>
    %23 = arith.cmpi eq, %14, %22 : vector<8x128xi32>
    %c2 = arith.constant 2 : index
    %24 = memref.load %arg2[%c2] : memref<128xf32, #tpu.memory_space<smem>>
    %25 = vector.broadcast %24 : f32 to vector<8x128xf32>
    %26 = arith.select %23, %25, %21 : vector<8x128xi1>, vector<8x128xf32>
    %c3_i32 = arith.constant 3 : i32
    %27 = vector.broadcast %c3_i32 : i32 to vector<8x128xi32>
    %28 = arith.cmpi eq, %14, %27 : vector<8x128xi32>
    %c3 = arith.constant 3 : index
    %29 = memref.load %arg2[%c3] : memref<128xf32, #tpu.memory_space<smem>>
    %30 = vector.broadcast %29 : f32 to vector<8x128xf32>
    %31 = arith.select %28, %30, %26 : vector<8x128xi1>, vector<8x128xf32>
    %c4_i32 = arith.constant 4 : i32
    %32 = vector.broadcast %c4_i32 : i32 to vector<8x128xi32>
    %33 = arith.cmpi eq, %14, %32 : vector<8x128xi32>
    %c4 = arith.constant 4 : index
    %34 = memref.load %arg2[%c4] : memref<128xf32, #tpu.memory_space<smem>>
    %35 = vector.broadcast %34 : f32 to vector<8x128xf32>
    %36 = arith.select %33, %35, %31 : vector<8x128xi1>, vector<8x128xf32>
    %c5_i32 = arith.constant 5 : i32
    %37 = vector.broadcast %c5_i32 : i32 to vector<8x128xi32>
    %38 = arith.cmpi eq, %14, %37 : vector<8x128xi32>
    %c5 = arith.constant 5 : index
    %39 = memref.load %arg2[%c5] : memref<128xf32, #tpu.memory_space<smem>>
    %40 = vector.broadcast %39 : f32 to vector<8x128xf32>
    %41 = arith.select %38, %40, %36 : vector<8x128xi1>, vector<8x128xf32>
    %c6_i32 = arith.constant 6 : i32
    %42 = vector.broadcast %c6_i32 : i32 to vector<8x128xi32>
    %43 = arith.cmpi eq, %14, %42 : vector<8x128xi32>
    %c6 = arith.constant 6 : index
    %44 = memref.load %arg2[%c6] : memref<128xf32, #tpu.memory_space<smem>>
    %45 = vector.broadcast %44 : f32 to vector<8x128xf32>
    %46 = arith.select %43, %45, %41 : vector<8x128xi1>, vector<8x128xf32>
    %c7_i32 = arith.constant 7 : i32
    %47 = vector.broadcast %c7_i32 : i32 to vector<8x128xi32>
    %48 = arith.cmpi eq, %14, %47 : vector<8x128xi32>
    %c7 = arith.constant 7 : index
    %49 = memref.load %arg2[%c7] : memref<128xf32, #tpu.memory_space<smem>>
    %50 = vector.broadcast %49 : f32 to vector<8x128xf32>
    %51 = arith.select %48, %50, %46 : vector<8x128xi1>, vector<8x128xf32>
    %c8_i32_5 = arith.constant 8 : i32
    %52 = vector.broadcast %c8_i32_5 : i32 to vector<8x128xi32>
    %53 = arith.cmpi eq, %14, %52 : vector<8x128xi32>
    %c8 = arith.constant 8 : index
    %54 = memref.load %arg2[%c8] : memref<128xf32, #tpu.memory_space<smem>>
    %55 = vector.broadcast %54 : f32 to vector<8x128xf32>
    %56 = arith.select %53, %55, %51 : vector<8x128xi1>, vector<8x128xf32>
    %c9_i32 = arith.constant 9 : i32
    %57 = vector.broadcast %c9_i32 : i32 to vector<8x128xi32>
    %58 = arith.cmpi eq, %14, %57 : vector<8x128xi32>
    %c9 = arith.constant 9 : index
    %59 = memref.load %arg2[%c9] : memref<128xf32, #tpu.memory_space<smem>>
    %60 = vector.broadcast %59 : f32 to vector<8x128xf32>
    %61 = arith.select %58, %60, %56 : vector<8x128xi1>, vector<8x128xf32>
    %c10_i32 = arith.constant 10 : i32
    %62 = vector.broadcast %c10_i32 : i32 to vector<8x128xi32>
    %63 = arith.cmpi eq, %14, %62 : vector<8x128xi32>
    %c10 = arith.constant 10 : index
    %64 = memref.load %arg2[%c10] : memref<128xf32, #tpu.memory_space<smem>>
    %65 = vector.broadcast %64 : f32 to vector<8x128xf32>
    %66 = arith.select %63, %65, %61 : vector<8x128xi1>, vector<8x128xf32>
    %c11_i32 = arith.constant 11 : i32
    %67 = vector.broadcast %c11_i32 : i32 to vector<8x128xi32>
    %68 = arith.cmpi eq, %14, %67 : vector<8x128xi32>
    %c11 = arith.constant 11 : index
    %69 = memref.load %arg2[%c11] : memref<128xf32, #tpu.memory_space<smem>>
    %70 = vector.broadcast %69 : f32 to vector<8x128xf32>
    %71 = arith.select %68, %70, %66 : vector<8x128xi1>, vector<8x128xf32>
    %c12_i32 = arith.constant 12 : i32
    %72 = vector.broadcast %c12_i32 : i32 to vector<8x128xi32>
    %73 = arith.cmpi eq, %14, %72 : vector<8x128xi32>
    %c12 = arith.constant 12 : index
    %74 = memref.load %arg2[%c12] : memref<128xf32, #tpu.memory_space<smem>>
    %75 = vector.broadcast %74 : f32 to vector<8x128xf32>
    %76 = arith.select %73, %75, %71 : vector<8x128xi1>, vector<8x128xf32>
    %c13_i32 = arith.constant 13 : i32
    %77 = vector.broadcast %c13_i32 : i32 to vector<8x128xi32>
    %78 = arith.cmpi eq, %14, %77 : vector<8x128xi32>
    %c13 = arith.constant 13 : index
    %79 = memref.load %arg2[%c13] : memref<128xf32, #tpu.memory_space<smem>>
    %80 = vector.broadcast %79 : f32 to vector<8x128xf32>
    %81 = arith.select %78, %80, %76 : vector<8x128xi1>, vector<8x128xf32>
    %c14_i32 = arith.constant 14 : i32
    %82 = vector.broadcast %c14_i32 : i32 to vector<8x128xi32>
    %83 = arith.cmpi eq, %14, %82 : vector<8x128xi32>
    %c14 = arith.constant 14 : index
    %84 = memref.load %arg2[%c14] : memref<128xf32, #tpu.memory_space<smem>>
    %85 = vector.broadcast %84 : f32 to vector<8x128xf32>
    %86 = arith.select %83, %85, %81 : vector<8x128xi1>, vector<8x128xf32>
    %c15_i32 = arith.constant 15 : i32
    %87 = vector.broadcast %c15_i32 : i32 to vector<8x128xi32>
    %88 = arith.cmpi eq, %14, %87 : vector<8x128xi32>
    %c15 = arith.constant 15 : index
    %89 = memref.load %arg2[%c15] : memref<128xf32, #tpu.memory_space<smem>>
    %90 = vector.broadcast %89 : f32 to vector<8x128xf32>
    %91 = arith.select %88, %90, %86 : vector<8x128xi1>, vector<8x128xf32>
    %c16_i32_6 = arith.constant 16 : i32
    %92 = vector.broadcast %c16_i32_6 : i32 to vector<8x128xi32>
    %93 = arith.cmpi eq, %14, %92 : vector<8x128xi32>
    %c16 = arith.constant 16 : index
    %94 = memref.load %arg2[%c16] : memref<128xf32, #tpu.memory_space<smem>>
    %95 = vector.broadcast %94 : f32 to vector<8x128xf32>
    %96 = arith.select %93, %95, %91 : vector<8x128xi1>, vector<8x128xf32>
    %c17_i32 = arith.constant 17 : i32
    %97 = vector.broadcast %c17_i32 : i32 to vector<8x128xi32>
    %98 = arith.cmpi eq, %14, %97 : vector<8x128xi32>
    %c17 = arith.constant 17 : index
    %99 = memref.load %arg2[%c17] : memref<128xf32, #tpu.memory_space<smem>>
    %100 = vector.broadcast %99 : f32 to vector<8x128xf32>
    %101 = arith.select %98, %100, %96 : vector<8x128xi1>, vector<8x128xf32>
    %c18_i32 = arith.constant 18 : i32
    %102 = vector.broadcast %c18_i32 : i32 to vector<8x128xi32>
    %103 = arith.cmpi eq, %14, %102 : vector<8x128xi32>
    %c18 = arith.constant 18 : index
    %104 = memref.load %arg2[%c18] : memref<128xf32, #tpu.memory_space<smem>>
    %105 = vector.broadcast %104 : f32 to vector<8x128xf32>
    %106 = arith.select %103, %105, %101 : vector<8x128xi1>, vector<8x128xf32>
    %c19_i32 = arith.constant 19 : i32
    %107 = vector.broadcast %c19_i32 : i32 to vector<8x128xi32>
    %108 = arith.cmpi eq, %14, %107 : vector<8x128xi32>
    %c19 = arith.constant 19 : index
    %109 = memref.load %arg2[%c19] : memref<128xf32, #tpu.memory_space<smem>>
    %110 = vector.broadcast %109 : f32 to vector<8x128xf32>
    %111 = arith.select %108, %110, %106 : vector<8x128xi1>, vector<8x128xf32>
    %c20_i32 = arith.constant 20 : i32
    %112 = vector.broadcast %c20_i32 : i32 to vector<8x128xi32>
    %113 = arith.cmpi eq, %14, %112 : vector<8x128xi32>
    %c20 = arith.constant 20 : index
    %114 = memref.load %arg2[%c20] : memref<128xf32, #tpu.memory_space<smem>>
    %115 = vector.broadcast %114 : f32 to vector<8x128xf32>
    %116 = arith.select %113, %115, %111 : vector<8x128xi1>, vector<8x128xf32>
    %c21_i32 = arith.constant 21 : i32
    %117 = vector.broadcast %c21_i32 : i32 to vector<8x128xi32>
    %118 = arith.cmpi eq, %14, %117 : vector<8x128xi32>
    %c21 = arith.constant 21 : index
    %119 = memref.load %arg2[%c21] : memref<128xf32, #tpu.memory_space<smem>>
    %120 = vector.broadcast %119 : f32 to vector<8x128xf32>
    %121 = arith.select %118, %120, %116 : vector<8x128xi1>, vector<8x128xf32>
    %c22_i32 = arith.constant 22 : i32
    %122 = vector.broadcast %c22_i32 : i32 to vector<8x128xi32>
    %123 = arith.cmpi eq, %14, %122 : vector<8x128xi32>
    %c22 = arith.constant 22 : index
    %124 = memref.load %arg2[%c22] : memref<128xf32, #tpu.memory_space<smem>>
    %125 = vector.broadcast %124 : f32 to vector<8x128xf32>
    %126 = arith.select %123, %125, %121 : vector<8x128xi1>, vector<8x128xf32>
    %c23_i32 = arith.constant 23 : i32
    %127 = vector.broadcast %c23_i32 : i32 to vector<8x128xi32>
    %128 = arith.cmpi eq, %14, %127 : vector<8x128xi32>
    %c23 = arith.constant 23 : index
    %129 = memref.load %arg2[%c23] : memref<128xf32, #tpu.memory_space<smem>>
    %130 = vector.broadcast %129 : f32 to vector<8x128xf32>
    %131 = arith.select %128, %130, %126 : vector<8x128xi1>, vector<8x128xf32>
    %c24 = arith.constant 24 : index
    %132 = memref.load %arg2[%c24] : memref<128xf32, #tpu.memory_space<smem>>
    %133 = vector.broadcast %132 : f32 to vector<8x128xf32>
    %c1_i32_7 = arith.constant 1 : i32
    %134 = vector.broadcast %c1_i32_7 : i32 to vector<8x128xi32>
    %135 = arith.cmpi eq, %10, %134 : vector<8x128xi32>
    %c25 = arith.constant 25 : index
    %136 = memref.load %arg2[%c25] : memref<128xf32, #tpu.memory_space<smem>>
    %137 = vector.broadcast %136 : f32 to vector<8x128xf32>
    %138 = arith.select %135, %137, %133 : vector<8x128xi1>, vector<8x128xf32>
    %c2_i32_8 = arith.constant 2 : i32
    %139 = vector.broadcast %c2_i32_8 : i32 to vector<8x128xi32>
    %140 = arith.cmpi eq, %10, %139 : vector<8x128xi32>
    %c26 = arith.constant 26 : index
    %141 = memref.load %arg2[%c26] : memref<128xf32, #tpu.memory_space<smem>>
    %142 = vector.broadcast %141 : f32 to vector<8x128xf32>
    %143 = arith.select %140, %142, %138 : vector<8x128xi1>, vector<8x128xf32>
    %c3_i32_9 = arith.constant 3 : i32
    %144 = vector.broadcast %c3_i32_9 : i32 to vector<8x128xi32>
    %145 = arith.cmpi eq, %10, %144 : vector<8x128xi32>
    %c27 = arith.constant 27 : index
    %146 = memref.load %arg2[%c27] : memref<128xf32, #tpu.memory_space<smem>>
    %147 = vector.broadcast %146 : f32 to vector<8x128xf32>
    %148 = arith.select %145, %147, %143 : vector<8x128xi1>, vector<8x128xf32>
    %c4_i32_10 = arith.constant 4 : i32
    %149 = vector.broadcast %c4_i32_10 : i32 to vector<8x128xi32>
    %150 = arith.cmpi eq, %10, %149 : vector<8x128xi32>
    %c28 = arith.constant 28 : index
    %151 = memref.load %arg2[%c28] : memref<128xf32, #tpu.memory_space<smem>>
    %152 = vector.broadcast %151 : f32 to vector<8x128xf32>
    %153 = arith.select %150, %152, %148 : vector<8x128xi1>, vector<8x128xf32>
    %c5_i32_11 = arith.constant 5 : i32
    %154 = vector.broadcast %c5_i32_11 : i32 to vector<8x128xi32>
    %155 = arith.cmpi eq, %10, %154 : vector<8x128xi32>
    %c29 = arith.constant 29 : index
    %156 = memref.load %arg2[%c29] : memref<128xf32, #tpu.memory_space<smem>>
    %157 = vector.broadcast %156 : f32 to vector<8x128xf32>
    %158 = arith.select %155, %157, %153 : vector<8x128xi1>, vector<8x128xf32>
    %c6_i32_12 = arith.constant 6 : i32
    %159 = vector.broadcast %c6_i32_12 : i32 to vector<8x128xi32>
    %160 = arith.cmpi eq, %10, %159 : vector<8x128xi32>
    %c30 = arith.constant 30 : index
    %161 = memref.load %arg2[%c30] : memref<128xf32, #tpu.memory_space<smem>>
    %162 = vector.broadcast %161 : f32 to vector<8x128xf32>
    %163 = arith.select %160, %162, %158 : vector<8x128xi1>, vector<8x128xf32>
    %164 = arith.addf %131, %163 : vector<8x128xf32>
    %c31 = arith.constant 31 : index
    %165 = memref.load %arg2[%c31] : memref<128xf32, #tpu.memory_space<smem>>
    %166 = vector.broadcast %165 : f32 to vector<8x128xf32>
    %c1_i32_13 = arith.constant 1 : i32
    %167 = vector.broadcast %c1_i32_13 : i32 to vector<8x128xi32>
    %168 = arith.cmpi eq, %6, %167 : vector<8x128xi32>
    %c32 = arith.constant 32 : index
    %169 = memref.load %arg2[%c32] : memref<128xf32, #tpu.memory_space<smem>>
    %170 = vector.broadcast %169 : f32 to vector<8x128xf32>
    %171 = arith.select %168, %170, %166 : vector<8x128xi1>, vector<8x128xf32>
    %c2_i32_14 = arith.constant 2 : i32
    %172 = vector.broadcast %c2_i32_14 : i32 to vector<8x128xi32>
    %173 = arith.cmpi eq, %6, %172 : vector<8x128xi32>
    %c33 = arith.constant 33 : index
    %174 = memref.load %arg2[%c33] : memref<128xf32, #tpu.memory_space<smem>>
    %175 = vector.broadcast %174 : f32 to vector<8x128xf32>
    %176 = arith.select %173, %175, %171 : vector<8x128xi1>, vector<8x128xf32>
    %c3_i32_15 = arith.constant 3 : i32
    %177 = vector.broadcast %c3_i32_15 : i32 to vector<8x128xi32>
    %178 = arith.cmpi eq, %6, %177 : vector<8x128xi32>
    %c34 = arith.constant 34 : index
    %179 = memref.load %arg2[%c34] : memref<128xf32, #tpu.memory_space<smem>>
    %180 = vector.broadcast %179 : f32 to vector<8x128xf32>
    %181 = arith.select %178, %180, %176 : vector<8x128xi1>, vector<8x128xf32>
    %c4_i32_16 = arith.constant 4 : i32
    %182 = vector.broadcast %c4_i32_16 : i32 to vector<8x128xi32>
    %183 = arith.cmpi eq, %6, %182 : vector<8x128xi32>
    %c35 = arith.constant 35 : index
    %184 = memref.load %arg2[%c35] : memref<128xf32, #tpu.memory_space<smem>>
    %185 = vector.broadcast %184 : f32 to vector<8x128xf32>
    %186 = arith.select %183, %185, %181 : vector<8x128xi1>, vector<8x128xf32>
    %c5_i32_17 = arith.constant 5 : i32
    %187 = vector.broadcast %c5_i32_17 : i32 to vector<8x128xi32>
    %188 = arith.cmpi eq, %6, %187 : vector<8x128xi32>
    %c36 = arith.constant 36 : index
    %189 = memref.load %arg2[%c36] : memref<128xf32, #tpu.memory_space<smem>>
    %190 = vector.broadcast %189 : f32 to vector<8x128xf32>
    %191 = arith.select %188, %190, %186 : vector<8x128xi1>, vector<8x128xf32>
    %c6_i32_18 = arith.constant 6 : i32
    %192 = vector.broadcast %c6_i32_18 : i32 to vector<8x128xi32>
    %193 = arith.cmpi eq, %6, %192 : vector<8x128xi32>
    %c37 = arith.constant 37 : index
    %194 = memref.load %arg2[%c37] : memref<128xf32, #tpu.memory_space<smem>>
    %195 = vector.broadcast %194 : f32 to vector<8x128xf32>
    %196 = arith.select %193, %195, %191 : vector<8x128xi1>, vector<8x128xf32>
    %c7_i32_19 = arith.constant 7 : i32
    %197 = vector.broadcast %c7_i32_19 : i32 to vector<8x128xi32>
    %198 = arith.cmpi eq, %6, %197 : vector<8x128xi32>
    %c38 = arith.constant 38 : index
    %199 = memref.load %arg2[%c38] : memref<128xf32, #tpu.memory_space<smem>>
    %200 = vector.broadcast %199 : f32 to vector<8x128xf32>
    %201 = arith.select %198, %200, %196 : vector<8x128xi1>, vector<8x128xf32>
    %c8_i32_20 = arith.constant 8 : i32
    %202 = vector.broadcast %c8_i32_20 : i32 to vector<8x128xi32>
    %203 = arith.cmpi eq, %6, %202 : vector<8x128xi32>
    %c39 = arith.constant 39 : index
    %204 = memref.load %arg2[%c39] : memref<128xf32, #tpu.memory_space<smem>>
    %205 = vector.broadcast %204 : f32 to vector<8x128xf32>
    %206 = arith.select %203, %205, %201 : vector<8x128xi1>, vector<8x128xf32>
    %c9_i32_21 = arith.constant 9 : i32
    %207 = vector.broadcast %c9_i32_21 : i32 to vector<8x128xi32>
    %208 = arith.cmpi eq, %6, %207 : vector<8x128xi32>
    %c40 = arith.constant 40 : index
    %209 = memref.load %arg2[%c40] : memref<128xf32, #tpu.memory_space<smem>>
    %210 = vector.broadcast %209 : f32 to vector<8x128xf32>
    %211 = arith.select %208, %210, %206 : vector<8x128xi1>, vector<8x128xf32>
    %c10_i32_22 = arith.constant 10 : i32
    %212 = vector.broadcast %c10_i32_22 : i32 to vector<8x128xi32>
    %213 = arith.cmpi eq, %6, %212 : vector<8x128xi32>
    %c41 = arith.constant 41 : index
    %214 = memref.load %arg2[%c41] : memref<128xf32, #tpu.memory_space<smem>>
    %215 = vector.broadcast %214 : f32 to vector<8x128xf32>
    %216 = arith.select %213, %215, %211 : vector<8x128xi1>, vector<8x128xf32>
    %c11_i32_23 = arith.constant 11 : i32
    %217 = vector.broadcast %c11_i32_23 : i32 to vector<8x128xi32>
    %218 = arith.cmpi eq, %6, %217 : vector<8x128xi32>
    %c42 = arith.constant 42 : index
    %219 = memref.load %arg2[%c42] : memref<128xf32, #tpu.memory_space<smem>>
    %220 = vector.broadcast %219 : f32 to vector<8x128xf32>
    %221 = arith.select %218, %220, %216 : vector<8x128xi1>, vector<8x128xf32>
    %c12_i32_24 = arith.constant 12 : i32
    %222 = vector.broadcast %c12_i32_24 : i32 to vector<8x128xi32>
    %223 = arith.cmpi eq, %6, %222 : vector<8x128xi32>
    %c43 = arith.constant 43 : index
    %224 = memref.load %arg2[%c43] : memref<128xf32, #tpu.memory_space<smem>>
    %225 = vector.broadcast %224 : f32 to vector<8x128xf32>
    %226 = arith.select %223, %225, %221 : vector<8x128xi1>, vector<8x128xf32>
    %c13_i32_25 = arith.constant 13 : i32
    %227 = vector.broadcast %c13_i32_25 : i32 to vector<8x128xi32>
    %228 = arith.cmpi eq, %6, %227 : vector<8x128xi32>
    %c44 = arith.constant 44 : index
    %229 = memref.load %arg2[%c44] : memref<128xf32, #tpu.memory_space<smem>>
    %230 = vector.broadcast %229 : f32 to vector<8x128xf32>
    %231 = arith.select %228, %230, %226 : vector<8x128xi1>, vector<8x128xf32>
    %c14_i32_26 = arith.constant 14 : i32
    %232 = vector.broadcast %c14_i32_26 : i32 to vector<8x128xi32>
    %233 = arith.cmpi eq, %6, %232 : vector<8x128xi32>
    %c45 = arith.constant 45 : index
    %234 = memref.load %arg2[%c45] : memref<128xf32, #tpu.memory_space<smem>>
    %235 = vector.broadcast %234 : f32 to vector<8x128xf32>
    %236 = arith.select %233, %235, %231 : vector<8x128xi1>, vector<8x128xf32>
    %c15_i32_27 = arith.constant 15 : i32
    %237 = vector.broadcast %c15_i32_27 : i32 to vector<8x128xi32>
    %238 = arith.cmpi eq, %6, %237 : vector<8x128xi32>
    %c46 = arith.constant 46 : index
    %239 = memref.load %arg2[%c46] : memref<128xf32, #tpu.memory_space<smem>>
    %240 = vector.broadcast %239 : f32 to vector<8x128xf32>
    %241 = arith.select %238, %240, %236 : vector<8x128xi1>, vector<8x128xf32>
    %c16_i32_28 = arith.constant 16 : i32
    %242 = vector.broadcast %c16_i32_28 : i32 to vector<8x128xi32>
    %243 = arith.cmpi eq, %6, %242 : vector<8x128xi32>
    %c47 = arith.constant 47 : index
    %244 = memref.load %arg2[%c47] : memref<128xf32, #tpu.memory_space<smem>>
    %245 = vector.broadcast %244 : f32 to vector<8x128xf32>
    %246 = arith.select %243, %245, %241 : vector<8x128xi1>, vector<8x128xf32>
    %c17_i32_29 = arith.constant 17 : i32
    %247 = vector.broadcast %c17_i32_29 : i32 to vector<8x128xi32>
    %248 = arith.cmpi eq, %6, %247 : vector<8x128xi32>
    %c48 = arith.constant 48 : index
    %249 = memref.load %arg2[%c48] : memref<128xf32, #tpu.memory_space<smem>>
    %250 = vector.broadcast %249 : f32 to vector<8x128xf32>
    %251 = arith.select %248, %250, %246 : vector<8x128xi1>, vector<8x128xf32>
    %c18_i32_30 = arith.constant 18 : i32
    %252 = vector.broadcast %c18_i32_30 : i32 to vector<8x128xi32>
    %253 = arith.cmpi eq, %6, %252 : vector<8x128xi32>
    %c49 = arith.constant 49 : index
    %254 = memref.load %arg2[%c49] : memref<128xf32, #tpu.memory_space<smem>>
    %255 = vector.broadcast %254 : f32 to vector<8x128xf32>
    %256 = arith.select %253, %255, %251 : vector<8x128xi1>, vector<8x128xf32>
    %c19_i32_31 = arith.constant 19 : i32
    %257 = vector.broadcast %c19_i32_31 : i32 to vector<8x128xi32>
    %258 = arith.cmpi eq, %6, %257 : vector<8x128xi32>
    %c50 = arith.constant 50 : index
    %259 = memref.load %arg2[%c50] : memref<128xf32, #tpu.memory_space<smem>>
    %260 = vector.broadcast %259 : f32 to vector<8x128xf32>
    %261 = arith.select %258, %260, %256 : vector<8x128xi1>, vector<8x128xf32>
    %c20_i32_32 = arith.constant 20 : i32
    %262 = vector.broadcast %c20_i32_32 : i32 to vector<8x128xi32>
    %263 = arith.cmpi eq, %6, %262 : vector<8x128xi32>
    %c51 = arith.constant 51 : index
    %264 = memref.load %arg2[%c51] : memref<128xf32, #tpu.memory_space<smem>>
    %265 = vector.broadcast %264 : f32 to vector<8x128xf32>
    %266 = arith.select %263, %265, %261 : vector<8x128xi1>, vector<8x128xf32>
    %c21_i32_33 = arith.constant 21 : i32
    %267 = vector.broadcast %c21_i32_33 : i32 to vector<8x128xi32>
    %268 = arith.cmpi eq, %6, %267 : vector<8x128xi32>
    %c52 = arith.constant 52 : index
    %269 = memref.load %arg2[%c52] : memref<128xf32, #tpu.memory_space<smem>>
    %270 = vector.broadcast %269 : f32 to vector<8x128xf32>
    %271 = arith.select %268, %270, %266 : vector<8x128xi1>, vector<8x128xf32>
    %c22_i32_34 = arith.constant 22 : i32
    %272 = vector.broadcast %c22_i32_34 : i32 to vector<8x128xi32>
    %273 = arith.cmpi eq, %6, %272 : vector<8x128xi32>
    %c53 = arith.constant 53 : index
    %274 = memref.load %arg2[%c53] : memref<128xf32, #tpu.memory_space<smem>>
    %275 = vector.broadcast %274 : f32 to vector<8x128xf32>
    %276 = arith.select %273, %275, %271 : vector<8x128xi1>, vector<8x128xf32>
    %c23_i32_35 = arith.constant 23 : i32
    %277 = vector.broadcast %c23_i32_35 : i32 to vector<8x128xi32>
    %278 = arith.cmpi eq, %6, %277 : vector<8x128xi32>
    %c54 = arith.constant 54 : index
    %279 = memref.load %arg2[%c54] : memref<128xf32, #tpu.memory_space<smem>>
    %280 = vector.broadcast %279 : f32 to vector<8x128xf32>
    %281 = arith.select %278, %280, %276 : vector<8x128xi1>, vector<8x128xf32>
    %c24_i32_36 = arith.constant 24 : i32
    %282 = vector.broadcast %c24_i32_36 : i32 to vector<8x128xi32>
    %283 = arith.cmpi eq, %6, %282 : vector<8x128xi32>
    %c55 = arith.constant 55 : index
    %284 = memref.load %arg2[%c55] : memref<128xf32, #tpu.memory_space<smem>>
    %285 = vector.broadcast %284 : f32 to vector<8x128xf32>
    %286 = arith.select %283, %285, %281 : vector<8x128xi1>, vector<8x128xf32>
    %c25_i32 = arith.constant 25 : i32
    %287 = vector.broadcast %c25_i32 : i32 to vector<8x128xi32>
    %288 = arith.cmpi eq, %6, %287 : vector<8x128xi32>
    %c56 = arith.constant 56 : index
    %289 = memref.load %arg2[%c56] : memref<128xf32, #tpu.memory_space<smem>>
    %290 = vector.broadcast %289 : f32 to vector<8x128xf32>
    %291 = arith.select %288, %290, %286 : vector<8x128xi1>, vector<8x128xf32>
    %c26_i32 = arith.constant 26 : i32
    %292 = vector.broadcast %c26_i32 : i32 to vector<8x128xi32>
    %293 = arith.cmpi eq, %6, %292 : vector<8x128xi32>
    %c57 = arith.constant 57 : index
    %294 = memref.load %arg2[%c57] : memref<128xf32, #tpu.memory_space<smem>>
    %295 = vector.broadcast %294 : f32 to vector<8x128xf32>
    %296 = arith.select %293, %295, %291 : vector<8x128xi1>, vector<8x128xf32>
    %c27_i32 = arith.constant 27 : i32
    %297 = vector.broadcast %c27_i32 : i32 to vector<8x128xi32>
    %298 = arith.cmpi eq, %6, %297 : vector<8x128xi32>
    %c58 = arith.constant 58 : index
    %299 = memref.load %arg2[%c58] : memref<128xf32, #tpu.memory_space<smem>>
    %300 = vector.broadcast %299 : f32 to vector<8x128xf32>
    %301 = arith.select %298, %300, %296 : vector<8x128xi1>, vector<8x128xf32>
    %c28_i32 = arith.constant 28 : i32
    %302 = vector.broadcast %c28_i32 : i32 to vector<8x128xi32>
    %303 = arith.cmpi eq, %6, %302 : vector<8x128xi32>
    %c59 = arith.constant 59 : index
    %304 = memref.load %arg2[%c59] : memref<128xf32, #tpu.memory_space<smem>>
    %305 = vector.broadcast %304 : f32 to vector<8x128xf32>
    %306 = arith.select %303, %305, %301 : vector<8x128xi1>, vector<8x128xf32>
    %c29_i32 = arith.constant 29 : i32
    %307 = vector.broadcast %c29_i32 : i32 to vector<8x128xi32>
    %308 = arith.cmpi eq, %6, %307 : vector<8x128xi32>
    %c60 = arith.constant 60 : index
    %309 = memref.load %arg2[%c60] : memref<128xf32, #tpu.memory_space<smem>>
    %310 = vector.broadcast %309 : f32 to vector<8x128xf32>
    %311 = arith.select %308, %310, %306 : vector<8x128xi1>, vector<8x128xf32>
    %c30_i32 = arith.constant 30 : i32
    %312 = vector.broadcast %c30_i32 : i32 to vector<8x128xi32>
    %313 = arith.cmpi eq, %6, %312 : vector<8x128xi32>
    %c61 = arith.constant 61 : index
    %314 = memref.load %arg2[%c61] : memref<128xf32, #tpu.memory_space<smem>>
    %315 = vector.broadcast %314 : f32 to vector<8x128xf32>
    %316 = arith.select %313, %315, %311 : vector<8x128xi1>, vector<8x128xf32>
    %c31_i32 = arith.constant 31 : i32
    %317 = vector.broadcast %c31_i32 : i32 to vector<8x128xi32>
    %318 = arith.cmpi eq, %6, %317 : vector<8x128xi32>
    %c62 = arith.constant 62 : index
    %319 = memref.load %arg2[%c62] : memref<128xf32, #tpu.memory_space<smem>>
    %320 = vector.broadcast %319 : f32 to vector<8x128xf32>
    %321 = arith.select %318, %320, %316 : vector<8x128xi1>, vector<8x128xf32>
    %322 = arith.addf %164, %321 : vector<8x128xf32>
    %c63 = arith.constant 63 : index
    %323 = memref.load %arg2[%c63] : memref<128xf32, #tpu.memory_space<smem>>
    %324 = vector.broadcast %323 : f32 to vector<8x128xf32>
    %c1_i32_37 = arith.constant 1 : i32
    %325 = vector.broadcast %c1_i32_37 : i32 to vector<8x128xi32>
    %326 = arith.cmpi eq, %2, %325 : vector<8x128xi32>
    %c64 = arith.constant 64 : index
    %327 = memref.load %arg2[%c64] : memref<128xf32, #tpu.memory_space<smem>>
    %328 = vector.broadcast %327 : f32 to vector<8x128xf32>
    %329 = arith.select %326, %328, %324 : vector<8x128xi1>, vector<8x128xf32>
    %c2_i32_38 = arith.constant 2 : i32
    %330 = vector.broadcast %c2_i32_38 : i32 to vector<8x128xi32>
    %331 = arith.cmpi eq, %2, %330 : vector<8x128xi32>
    %c65 = arith.constant 65 : index
    %332 = memref.load %arg2[%c65] : memref<128xf32, #tpu.memory_space<smem>>
    %333 = vector.broadcast %332 : f32 to vector<8x128xf32>
    %334 = arith.select %331, %333, %329 : vector<8x128xi1>, vector<8x128xf32>
    %c3_i32_39 = arith.constant 3 : i32
    %335 = vector.broadcast %c3_i32_39 : i32 to vector<8x128xi32>
    %336 = arith.cmpi eq, %2, %335 : vector<8x128xi32>
    %c66 = arith.constant 66 : index
    %337 = memref.load %arg2[%c66] : memref<128xf32, #tpu.memory_space<smem>>
    %338 = vector.broadcast %337 : f32 to vector<8x128xf32>
    %339 = arith.select %336, %338, %334 : vector<8x128xi1>, vector<8x128xf32>
    %c4_i32_40 = arith.constant 4 : i32
    %340 = vector.broadcast %c4_i32_40 : i32 to vector<8x128xi32>
    %341 = arith.cmpi eq, %2, %340 : vector<8x128xi32>
    %c67 = arith.constant 67 : index
    %342 = memref.load %arg2[%c67] : memref<128xf32, #tpu.memory_space<smem>>
    %343 = vector.broadcast %342 : f32 to vector<8x128xf32>
    %344 = arith.select %341, %343, %339 : vector<8x128xi1>, vector<8x128xf32>
    %c5_i32_41 = arith.constant 5 : i32
    %345 = vector.broadcast %c5_i32_41 : i32 to vector<8x128xi32>
    %346 = arith.cmpi eq, %2, %345 : vector<8x128xi32>
    %c68 = arith.constant 68 : index
    %347 = memref.load %arg2[%c68] : memref<128xf32, #tpu.memory_space<smem>>
    %348 = vector.broadcast %347 : f32 to vector<8x128xf32>
    %349 = arith.select %346, %348, %344 : vector<8x128xi1>, vector<8x128xf32>
    %c6_i32_42 = arith.constant 6 : i32
    %350 = vector.broadcast %c6_i32_42 : i32 to vector<8x128xi32>
    %351 = arith.cmpi eq, %2, %350 : vector<8x128xi32>
    %c69 = arith.constant 69 : index
    %352 = memref.load %arg2[%c69] : memref<128xf32, #tpu.memory_space<smem>>
    %353 = vector.broadcast %352 : f32 to vector<8x128xf32>
    %354 = arith.select %351, %353, %349 : vector<8x128xi1>, vector<8x128xf32>
    %c7_i32_43 = arith.constant 7 : i32
    %355 = vector.broadcast %c7_i32_43 : i32 to vector<8x128xi32>
    %356 = arith.cmpi eq, %2, %355 : vector<8x128xi32>
    %c70 = arith.constant 70 : index
    %357 = memref.load %arg2[%c70] : memref<128xf32, #tpu.memory_space<smem>>
    %358 = vector.broadcast %357 : f32 to vector<8x128xf32>
    %359 = arith.select %356, %358, %354 : vector<8x128xi1>, vector<8x128xf32>
    %c8_i32_44 = arith.constant 8 : i32
    %360 = vector.broadcast %c8_i32_44 : i32 to vector<8x128xi32>
    %361 = arith.cmpi eq, %2, %360 : vector<8x128xi32>
    %c71 = arith.constant 71 : index
    %362 = memref.load %arg2[%c71] : memref<128xf32, #tpu.memory_space<smem>>
    %363 = vector.broadcast %362 : f32 to vector<8x128xf32>
    %364 = arith.select %361, %363, %359 : vector<8x128xi1>, vector<8x128xf32>
    %c9_i32_45 = arith.constant 9 : i32
    %365 = vector.broadcast %c9_i32_45 : i32 to vector<8x128xi32>
    %366 = arith.cmpi eq, %2, %365 : vector<8x128xi32>
    %c72 = arith.constant 72 : index
    %367 = memref.load %arg2[%c72] : memref<128xf32, #tpu.memory_space<smem>>
    %368 = vector.broadcast %367 : f32 to vector<8x128xf32>
    %369 = arith.select %366, %368, %364 : vector<8x128xi1>, vector<8x128xf32>
    %c10_i32_46 = arith.constant 10 : i32
    %370 = vector.broadcast %c10_i32_46 : i32 to vector<8x128xi32>
    %371 = arith.cmpi eq, %2, %370 : vector<8x128xi32>
    %c73 = arith.constant 73 : index
    %372 = memref.load %arg2[%c73] : memref<128xf32, #tpu.memory_space<smem>>
    %373 = vector.broadcast %372 : f32 to vector<8x128xf32>
    %374 = arith.select %371, %373, %369 : vector<8x128xi1>, vector<8x128xf32>
    %c11_i32_47 = arith.constant 11 : i32
    %375 = vector.broadcast %c11_i32_47 : i32 to vector<8x128xi32>
    %376 = arith.cmpi eq, %2, %375 : vector<8x128xi32>
    %c74 = arith.constant 74 : index
    %377 = memref.load %arg2[%c74] : memref<128xf32, #tpu.memory_space<smem>>
    %378 = vector.broadcast %377 : f32 to vector<8x128xf32>
    %379 = arith.select %376, %378, %374 : vector<8x128xi1>, vector<8x128xf32>
    %c12_i32_48 = arith.constant 12 : i32
    %380 = vector.broadcast %c12_i32_48 : i32 to vector<8x128xi32>
    %381 = arith.cmpi eq, %2, %380 : vector<8x128xi32>
    %c75 = arith.constant 75 : index
    %382 = memref.load %arg2[%c75] : memref<128xf32, #tpu.memory_space<smem>>
    %383 = vector.broadcast %382 : f32 to vector<8x128xf32>
    %384 = arith.select %381, %383, %379 : vector<8x128xi1>, vector<8x128xf32>
    %385 = arith.addf %322, %384 : vector<8x128xf32>
    %c0_49 = arith.constant 0 : index
    %386 = memref.load %arg3[%c0_49] : memref<1xf32, #tpu.memory_space<smem>>
    %387 = vector.broadcast %386 : f32 to vector<8x128xf32>
    %388 = arith.addf %385, %387 : vector<8x128xf32>
    %c0_50 = arith.constant 0 : index
    %c0_51 = arith.constant 0 : index
    %389 = vector.load %arg4[%c0_50, %c0_51] : memref<8x128xf32, #tpu.memory_space<vmem>>, vector<8x128xf32>
    tpu.vector_store %arg4[%c0_50, %c0_51], %388 {strides = array<i32>} : memref<8x128xf32, #tpu.memory_space<vmem>>, vector<8x128xf32>,
    return
  }
  func.func @transform_0(%arg0: i32) -> (i32, i32) {
    %c0_i32 = arith.constant 0 : i32
    %c0_i32_0 = arith.constant 0 : i32
    return %arg0, %c0_i32 : i32, i32
  }
  func.func @transform_1(%arg0: i32) -> i32 {
    %c0_i32 = arith.constant 0 : i32
    %c0_i32_0 = arith.constant 0 : i32
    return %c0_i32 : i32
  }
  func.func @transform_2(%arg0: i32) -> i32 {
    %c0_i32 = arith.constant 0 : i32
    %c0_i32_0 = arith.constant 0 : i32
    return %c0_i32 : i32
  }
  func.func @transform_3(%arg0: i32) -> (i32, i32) {
    %c0_i32 = arith.constant 0 : i32
    %c0_i32_0 = arith.constant 0 : i32
    return %arg0, %c0_i32 : i32, i32
  }
}

</mosaic_0001>

<llo_original>
// kernel: tpu_custom_call.1
$region0: #{tpu_custom_call.1}
  #allocation0 [shape = 'u32[]', space=smem, size = 0x4, offset = 0x4, fixed_abs, tag = 'smem constant byte address 0x4 - core index']
  #allocation1 [shape = 'u32[144,128]{1,0:T(1,128)}', space=vmem, size = 0x12000, scoped, tag = 'internal scratch']
  #allocation2 [shape = 'f32[1]{0:T(128)S(6)}', space=smem, size = 0x200, scoped, tag = 'scoped memory for tpu_custom_call.1']
  %s0 = inlined_call_operand.hbm [shape: s32[8,128], index: 0, kind: input, shape index: {}]
  %s1 = inlined_call_operand.vmem [shape: f32[128], index: 1, kind: input, shape index: {}]
  %s2 = inlined_call_operand.<no memory space> [shape: f32[1], index: 2, kind: input, shape index: {}]
  %s3 = inlined_call_operand.hbm [shape: f32[8,128], index: 3, kind: output, shape index: {}]
  %s4 = sld [smem:[#allocation0]]
  $region30: #{tpu_custom_call.1} parent=0
    _
  %s6 = ssub.s32 1, %s4
  %s7 = scalar_select 0, %s6, %s4
  %8 = sst [smem:[#allocation2]] %s2
  $region1: #{tpu_custom_call.1} parent=0
    #allocation3 [shape = 'u8[4096]{0}', space=vmem, size = 0x1000, scoped, tag = 'input window, operand 0, single buffered']
    #allocation4 [shape = 's32[1]{0}', space=sflag, size = 0x4, scoped, tag = 'scoped memory for tpu_custom_call.1']
    #allocation5 [shape = 's32[1]{0}', space=sflag, size = 0x4, scoped, tag = 'scoped memory for tpu_custom_call.1']
    #allocation6 [shape = 's32[1]{0}', space=sflag, size = 0x4, scoped, tag = 'scoped memory for tpu_custom_call.1']
    #allocation7 [shape = 'u8[512]{0}', space=smem, size = 0x200, scoped, tag = 'input window, operand 1, single buffered']
    #allocation8 [shape = 'u8[4096]{0}', space=vmem, size = 0x1000, scoped, tag = 'output window, operand 0, single buffered']
    %9 = vsyncpa [#allocation4], 0
    %10 = vsyncpa [#allocation6], 0
    %11 = vsyncpa [#allocation5], 0
    // Predicated region
    $region2: #{tpu_custom_call.1} parent=1 // pred_check
      _
    $region3: #{tpu_custom_call.1} parent=1 // pred_check_branch
      %13 = sbr.rel (0) target = $region5
    $region4: #{tpu_custom_call.1} parent=1 // pred_region
      %s15 = ssub.s32 128, 128
      %16 = vsyncadd [#allocation4], %s15
      %s18 = sshll.u32 [#allocation3], 4
      %s19 = int_to_ptr.vmem [resolvable:$true] %s18
      %21 = dma.hbm_to_vmem [thread:$0]  %s0, 128, %s19, [#allocation4]
    $region5: #{tpu_custom_call.1} parent=1 // pred_fallthru
      _
    // Predicated region
    $region6: #{tpu_custom_call.1} parent=1 // pred_check
      _
    $region7: #{tpu_custom_call.1} parent=1 // pred_check_branch
      %23 = sbr.rel (0) target = $region9
    $region8: #{tpu_custom_call.1} parent=1 // pred_region
      %s25 = ssub.s32 16, 16
      %26 = vsyncadd [#allocation6], %s25
      %s28 = sshll.u32 %s1, 4
      %s29 = int_to_ptr.vmem [resolvable:$true] %s28
      %31 = dma.vmem_to_smem %s29, 16, [#allocation7], [#allocation6]
    $region9: #{tpu_custom_call.1} parent=1 // pred_fallthru
      _
    // Predicated region
    $region10: #{tpu_custom_call.1} parent=1 // pred_check
      _
    $region11: #{tpu_custom_call.1} parent=1 // pred_check_branch
      %33 = sbr.rel (0) target = $region13
    $region12: #{tpu_custom_call.1} parent=1 // pred_region
      _
    $region13: #{tpu_custom_call.1} parent=1 // pred_fallthru
      _
    // Predicated region
    $region14: #{tpu_custom_call.1} parent=1 // pred_check
      _
    $region15: #{tpu_custom_call.1} parent=1 // pred_check_branch
      %35 = sbr.rel (0) target = $region17
    $region16: #{tpu_custom_call.1} parent=1 // pred_region
      %36 = dma.done [#allocation4], 128
    $region17: #{tpu_custom_call.1} parent=1 // pred_fallthru
      _
    // Predicated region
    $region18: #{tpu_custom_call.1} parent=1 // pred_check
      _
    $region19: #{tpu_custom_call.1} parent=1 // pred_check_branch
      %38 = sbr.rel (0) target = $region21
    $region20: #{tpu_custom_call.1} parent=1 // pred_region
      %39 = dma.done [#allocation6], 16
    $region21: #{tpu_custom_call.1} parent=1 // pred_fallthru
      _
    %40 = sfence
    %v41 = vld [vmem:[#allocation3] sm:$0xff]
    %v42 = vand.u32 %v41, 255
    %v43 = vshra.s32 %v41, 8
    %v44 = vand.u32 %v43, 255
    %v45 = vshra.s32 %v41, 16
    %v46 = vand.u32 %v45, 255
    %v47 = vshra.s32 %v41, 24
    %v48 = vand.u32 %v47, 255
    %s49 = sld [smem:[#allocation7]]
    %v50 = vstv %s49
    %vm51 = vcmp.eq.s32.totalorder %v48, 1
    %s52 = sld [smem:[#allocation7 + $0x1]]
    %v53 = vstv %s52
    %v54 = vsel %vm51, %v53, %v50
    %vm55 = vcmp.eq.s32.totalorder %v48, 2
    %s56 = sld [smem:[#allocation7 + $0x2]]
    %v57 = vstv %s56
    %v58 = vsel %vm55, %v57, %v54
    %vm59 = vcmp.eq.s32.totalorder %v48, 3
    %s60 = sld [smem:[#allocation7 + $0x3]]
    %v61 = vstv %s60
    %v62 = vsel %vm59, %v61, %v58
    %vm63 = vcmp.eq.s32.totalorder %v48, 4
    %s64 = sld [smem:[#allocation7 + $0x4]]
    %v65 = vstv %s64
    %v66 = vsel %vm63, %v65, %v62
    %vm67 = vcmp.eq.s32.totalorder %v48, 5
    %s68 = sld [smem:[#allocation7 + $0x5]]
    %v69 = vstv %s68
    %v70 = vsel %vm67, %v69, %v66
    %vm71 = vcmp.eq.s32.totalorder %v48, 6
    %s72 = sld [smem:[#allocation7 + $0x6]]
    %v73 = vstv %s72
    %v74 = vsel %vm71, %v73, %v70
    %vm75 = vcmp.eq.s32.totalorder %v48, 7
    %s76 = sld [smem:[#allocation7 + $0x7]]
    %v77 = vstv %s76
    %v78 = vsel %vm75, %v77, %v74
    %vm79 = vcmp.eq.s32.totalorder %v48, 8
    %s80 = sld [smem:[#allocation7 + $0x8]]
    %v81 = vstv %s80
    %v82 = vsel %vm79, %v81, %v78
    %vm83 = vcmp.eq.s32.totalorder %v48, 9
    %s84 = sld [smem:[#allocation7 + $0x9]]
    %v85 = vstv %s84
    %v86 = vsel %vm83, %v85, %v82
    %vm87 = vcmp.eq.s32.totalorder %v48, 10
    %s88 = sld [smem:[#allocation7 + $0xa]]
    %v89 = vstv %s88
    %v90 = vsel %vm87, %v89, %v86
    %vm91 = vcmp.eq.s32.totalorder %v48, 11
    %s92 = sld [smem:[#allocation7 + $0xb]]
    %v93 = vstv %s92
    %v94 = vsel %vm91, %v93, %v90
    %vm95 = vcmp.eq.s32.totalorder %v48, 12
    %s96 = sld [smem:[#allocation7 + $0xc]]
    %v97 = vstv %s96
    %v98 = vsel %vm95, %v97, %v94
    %vm99 = vcmp.eq.s32.totalorder %v48, 13
    %s100 = sld [smem:[#allocation7 + $0xd]]
    %v101 = vstv %s100
    %v102 = vsel %vm99, %v101, %v98
    %vm103 = vcmp.eq.s32.totalorder %v48, 14
    %s104 = sld [smem:[#allocation7 + $0xe]]
    %v105 = vstv %s104
    %v106 = vsel %vm103, %v105, %v102
    %vm107 = vcmp.eq.s32.totalorder %v48, 15
    %s108 = sld [smem:[#allocation7 + $0xf]]
    %v109 = vstv %s108
    %v110 = vsel %vm107, %v109, %v106
    %vm111 = vcmp.eq.s32.totalorder %v48, 16
    %s112 = sld [smem:[#allocation7 + $0x10]]
    %v113 = vstv %s112
    %v114 = vsel %vm111, %v113, %v110
    %vm115 = vcmp.eq.s32.totalorder %v48, 17
    %s116 = sld [smem:[#allocation7 + $0x11]]
    %v117 = vstv %s116
    %v118 = vsel %vm115, %v117, %v114
    %vm119 = vcmp.eq.s32.totalorder %v48, 18
    %s120 = sld [smem:[#allocation7 + $0x12]]
    %v121 = vstv %s120
    %v122 = vsel %vm119, %v121, %v118
    %vm123 = vcmp.eq.s32.totalorder %v48, 19
    %s124 = sld [smem:[#allocation7 + $0x13]]
    %v125 = vstv %s124
    %v126 = vsel %vm123, %v125, %v122
    %vm127 = vcmp.eq.s32.totalorder %v48, 20
    %s128 = sld [smem:[#allocation7 + $0x14]]
    %v129 = vstv %s128
    %v130 = vsel %vm127, %v129, %v126
    %vm131 = vcmp.eq.s32.totalorder %v48, 21
    %s132 = sld [smem:[#allocation7 + $0x15]]
    %v133 = vstv %s132
    %v134 = vsel %vm131, %v133, %v130
    %vm135 = vcmp.eq.s32.totalorder %v48, 22
    %s136 = sld [smem:[#allocation7 + $0x16]]
    %v137 = vstv %s136
    %v138 = vsel %vm135, %v137, %v134
    %vm139 = vcmp.eq.s32.totalorder %v48, 23
    %s140 = sld [smem:[#allocation7 + $0x17]]
    %v141 = vstv %s140
    %v142 = vsel %vm139, %v141, %v138
    %s143 = sld [smem:[#allocation7 + $0x18]]
    %v144 = vstv %s143
    %vm145 = vcmp.eq.s32.totalorder %v46, 1
    %s146 = sld [smem:[#allocation7 + $0x19]]
    %v147 = vstv %s146
    %v148 = vsel %vm145, %v147, %v144
    %vm149 = vcmp.eq.s32.totalorder %v46, 2
    %s150 = sld [smem:[#allocation7 + $0x1a]]
    %v151 = vstv %s150
    %v152 = vsel %vm149, %v151, %v148
    %vm153 = vcmp.eq.s32.totalorder %v46, 3
    %s154 = sld [smem:[#allocation7 + $0x1b]]
    %v155 = vstv %s154
    %v156 = vsel %vm153, %v155, %v152
    %vm157 = vcmp.eq.s32.totalorder %v46, 4
    %s158 = sld [smem:[#allocation7 + $0x1c]]
    %v159 = vstv %s158
    %v160 = vsel %vm157, %v159, %v156
    %vm161 = vcmp.eq.s32.totalorder %v46, 5
    %s162 = sld [smem:[#allocation7 + $0x1d]]
    %v163 = vstv %s162
    %v164 = vsel %vm161, %v163, %v160
    %vm165 = vcmp.eq.s32.totalorder %v46, 6
    %s166 = sld [smem:[#allocation7 + $0x1e]]
    %v167 = vstv %s166
    %v168 = vsel %vm165, %v167, %v164
    %v169 = vadd.f32 %v142, %v168
    %s170 = sld [smem:[#allocation7 + $0x1f]]
    %v171 = vstv %s170
    %vm172 = vcmp.eq.s32.totalorder %v44, 1
    %s173 = sld [smem:[#allocation7 + $0x20]]
    %v174 = vstv %s173
    %v175 = vsel %vm172, %v174, %v171
    %vm176 = vcmp.eq.s32.totalorder %v44, 2
    %s177 = sld [smem:[#allocation7 + $0x21]]
    %v178 = vstv %s177
    %v179 = vsel %vm176, %v178, %v175
    %vm180 = vcmp.eq.s32.totalorder %v44, 3
    %s181 = sld [smem:[#allocation7 + $0x22]]
    %v182 = vstv %s181
    %v183 = vsel %vm180, %v182, %v179
    %vm184 = vcmp.eq.s32.totalorder %v44, 4
    %s185 = sld [smem:[#allocation7 + $0x23]]
    %v186 = vstv %s185
    %v187 = vsel %vm184, %v186, %v183
    %vm188 = vcmp.eq.s32.totalorder %v44, 5
    %s189 = sld [smem:[#allocation7 + $0x24]]
    %v190 = vstv %s189
    %v191 = vsel %vm188, %v190, %v187
    %vm192 = vcmp.eq.s32.totalorder %v44, 6
    %s193 = sld [smem:[#allocation7 + $0x25]]
    %v194 = vstv %s193
    %v195 = vsel %vm192, %v194, %v191
    %vm196 = vcmp.eq.s32.totalorder %v44, 7
    %s197 = sld [smem:[#allocation7 + $0x26]]
    %v198 = vstv %s197
    %v199 = vsel %vm196, %v198, %v195
    %vm200 = vcmp.eq.s32.totalorder %v44, 8
    %s201 = sld [smem:[#allocation7 + $0x27]]
    %v202 = vstv %s201
    %v203 = vsel %vm200, %v202, %v199
    %vm204 = vcmp.eq.s32.totalorder %v44, 9
    %s205 = sld [smem:[#allocation7 + $0x28]]
    %v206 = vstv %s205
    %v207 = vsel %vm204, %v206, %v203
    %vm208 = vcmp.eq.s32.totalorder %v44, 10
    %s209 = sld [smem:[#allocation7 + $0x29]]
    %v210 = vstv %s209
    %v211 = vsel %vm208, %v210, %v207
    %vm212 = vcmp.eq.s32.totalorder %v44, 11
    %s213 = sld [smem:[#allocation7 + $0x2a]]
    %v214 = vstv %s213
    %v215 = vsel %vm212, %v214, %v211
    %vm216 = vcmp.eq.s32.totalorder %v44, 12
    %s217 = sld [smem:[#allocation7 + $0x2b]]
    %v218 = vstv %s217
    %v219 = vsel %vm216, %v218, %v215
    %vm220 = vcmp.eq.s32.totalorder %v44, 13
    %s221 = sld [smem:[#allocation7 + $0x2c]]
    %v222 = vstv %s221
    %v223 = vsel %vm220, %v222, %v219
    %vm224 = vcmp.eq.s32.totalorder %v44, 14
    %s225 = sld [smem:[#allocation7 + $0x2d]]
    %v226 = vstv %s225
    %v227 = vsel %vm224, %v226, %v223
    %vm228 = vcmp.eq.s32.totalorder %v44, 15
    %s229 = sld [smem:[#allocation7 + $0x2e]]
    %v230 = vstv %s229
    %v231 = vsel %vm228, %v230, %v227
    %vm232 = vcmp.eq.s32.totalorder %v44, 16
    %s233 = sld [smem:[#allocation7 + $0x2f]]
    %v234 = vstv %s233
    %v235 = vsel %vm232, %v234, %v231
    %vm236 = vcmp.eq.s32.totalorder %v44, 17
    %s237 = sld [smem:[#allocation7 + $0x30]]
    %v238 = vstv %s237
    %v239 = vsel %vm236, %v238, %v235
    %vm240 = vcmp.eq.s32.totalorder %v44, 18
    %s241 = sld [smem:[#allocation7 + $0x31]]
    %v242 = vstv %s241
    %v243 = vsel %vm240, %v242, %v239
    %vm244 = vcmp.eq.s32.totalorder %v44, 19
    %s245 = sld [smem:[#allocation7 + $0x32]]
    %v246 = vstv %s245
    %v247 = vsel %vm244, %v246, %v243
    %vm248 = vcmp.eq.s32.totalorder %v44, 20
    %s249 = sld [smem:[#allocation7 + $0x33]]
    %v250 = vstv %s249
    %v251 = vsel %vm248, %v250, %v247
    %vm252 = vcmp.eq.s32.totalorder %v44, 21
    %s253 = sld [smem:[#allocation7 + $0x34]]
    %v254 = vstv %s253
    %v255 = vsel %vm252, %v254, %v251
    %vm256 = vcmp.eq.s32.totalorder %v44, 22
    %s257 = sld [smem:[#allocation7 + $0x35]]
    %v258 = vstv %s257
    %v259 = vsel %vm256, %v258, %v255
    %vm260 = vcmp.eq.s32.totalorder %v44, 23
    %s261 = sld [smem:[#allocation7 + $0x36]]
    %v262 = vstv %s261
    %v263 = vsel %vm260, %v262, %v259
    %vm264 = vcmp.eq.s32.totalorder %v44, 24
    %s265 = sld [smem:[#allocation7 + $0x37]]
    %v266 = vstv %s265
    %v267 = vsel %vm264, %v266, %v263
    %vm268 = vcmp.eq.s32.totalorder %v44, 25
    %s269 = sld [smem:[#allocation7 + $0x38]]
    %v270 = vstv %s269
    %v271 = vsel %vm268, %v270, %v267
    %vm272 = vcmp.eq.s32.totalorder %v44, 26
    %s273 = sld [smem:[#allocation7 + $0x39]]
    %v274 = vstv %s273
    %v275 = vsel %vm272, %v274, %v271
    %vm276 = vcmp.eq.s32.totalorder %v44, 27
    %s277 = sld [smem:[#allocation7 + $0x3a]]
    %v278 = vstv %s277
    %v279 = vsel %vm276, %v278, %v275
    %vm280 = vcmp.eq.s32.totalorder %v44, 28
    %s281 = sld [smem:[#allocation7 + $0x3b]]
    %v282 = vstv %s281
    %v283 = vsel %vm280, %v282, %v279
    %vm284 = vcmp.eq.s32.totalorder %v44, 29
    %s285 = sld [smem:[#allocation7 + $0x3c]]
    %v286 = vstv %s285
    %v287 = vsel %vm284, %v286, %v283
    %vm288 = vcmp.eq.s32.totalorder %v44, 30
    %s289 = sld [smem:[#allocation7 + $0x3d]]
    %v290 = vstv %s289
    %v291 = vsel %vm288, %v290, %v287
    %vm292 = vcmp.eq.s32.totalorder %v44, 31
    %s293 = sld [smem:[#allocation7 + $0x3e]]
    %v294 = vstv %s293
    %v295 = vsel %vm292, %v294, %v291
    %v296 = vadd.f32 %v169, %v295
    %s297 = sld [smem:[#allocation7 + $0x3f]]
    %v298 = vstv %s297
    %vm299 = vcmp.eq.s32.totalorder %v42, 1
    %s300 = sld [smem:[#allocation7 + $0x40]]
    %v301 = vstv %s300
    %v302 = vsel %vm299, %v301, %v298
    %vm303 = vcmp.eq.s32.totalorder %v42, 2
    %s304 = sld [smem:[#allocation7 + $0x41]]
    %v305 = vstv %s304
    %v306 = vsel %vm303, %v305, %v302
    %vm307 = vcmp.eq.s32.totalorder %v42, 3
    %s308 = sld [smem:[#allocation7 + $0x42]]
    %v309 = vstv %s308
    %v310 = vsel %vm307, %v309, %v306
    %vm311 = vcmp.eq.s32.totalorder %v42, 4
    %s312 = sld [smem:[#allocation7 + $0x43]]
    %v313 = vstv %s312
    %v314 = vsel %vm311, %v313, %v310
    %vm315 = vcmp.eq.s32.totalorder %v42, 5
    %s316 = sld [smem:[#allocation7 + $0x44]]
    %v317 = vstv %s316
    %v318 = vsel %vm315, %v317, %v314
    %vm319 = vcmp.eq.s32.totalorder %v42, 6
    %s320 = sld [smem:[#allocation7 + $0x45]]
    %v321 = vstv %s320
    %v322 = vsel %vm319, %v321, %v318
    %vm323 = vcmp.eq.s32.totalorder %v42, 7
    %s324 = sld [smem:[#allocation7 + $0x46]]
    %v325 = vstv %s324
    %v326 = vsel %vm323, %v325, %v322
    %vm327 = vcmp.eq.s32.totalorder %v42, 8
    %s328 = sld [smem:[#allocation7 + $0x47]]
    %v329 = vstv %s328
    %v330 = vsel %vm327, %v329, %v326
    %vm331 = vcmp.eq.s32.totalorder %v42, 9
    %s332 = sld [smem:[#allocation7 + $0x48]]
    %v333 = vstv %s332
    %v334 = vsel %vm331, %v333, %v330
    %vm335 = vcmp.eq.s32.totalorder %v42, 10
    %s336 = sld [smem:[#allocation7 + $0x49]]
    %v337 = vstv %s336
    %v338 = vsel %vm335, %v337, %v334
    %vm339 = vcmp.eq.s32.totalorder %v42, 11
    %s340 = sld [smem:[#allocation7 + $0x4a]]
    %v341 = vstv %s340
    %v342 = vsel %vm339, %v341, %v338
    %vm343 = vcmp.eq.s32.totalorder %v42, 12
    %s344 = sld [smem:[#allocation7 + $0x4b]]
    %v345 = vstv %s344
    %v346 = vsel %vm343, %v345, %v342
    %v347 = vadd.f32 %v296, %v346
    %s348 = sld [smem:[#allocation2]]
    %v349 = vstv %s348
    %v350 = vadd.f32 %v347, %v349
    %351 = vst [vmem:[#allocation8] sm:$0xff] %v350
    // Predicated region
    $region22: #{tpu_custom_call.1} parent=1 // pred_check
      _
    $region23: #{tpu_custom_call.1} parent=1 // pred_check_branch
      %353 = sbr.rel (0) target = $region25
    $region24: #{tpu_custom_call.1} parent=1 // pred_region
      %s355 = ssub.s32 128, 128
      %356 = vsyncadd [#allocation5], %s355
      %s358 = sshll.u32 [#allocation8], 4
      %s359 = int_to_ptr.vmem [resolvable:$true] %s358
      %361 = dma.vmem_to_hbm [thread:$0]  %s359, 128, %s3, [#allocation5]
    $region25: #{tpu_custom_call.1} parent=1 // pred_fallthru
      _
    // Predicated region
    $region26: #{tpu_custom_call.1} parent=1 // pred_check
      _
    $region27: #{tpu_custom_call.1} parent=1 // pred_check_branch
      %363 = sbr.rel (0) target = $region29
    $region28: #{tpu_custom_call.1} parent=1 // pred_region
      %364 = dma.done [#allocation5], 128
    $region29: #{tpu_custom_call.1} parent=1 // pred_fallthru
      _
    %365 = vsyncpa [#allocation4], 1
    %366 = vsyncpa [#allocation5], 1
    %367 = vsyncpa [#allocation6], 1

</llo_original>
